<compile_context>
chip_gen: v7x
topology: tpu7x:2x2x1
jax: 0.10.0
libtpu: 0.0.40
codegen_flags: <defaults>
</compile_context>

<pallas_src>
import functools

import jax
import jax.numpy as jnp
from jax.experimental import pallas as pl
from jax.experimental.pallas import tpu as pltpu


def _sdpa_kernel(q_ref, k_ref, v_ref, out_ref, attn_ref, *, inv_temperature, tb):
    # Blocks: q (TB, Lq, Dk), k (TB, Lk, Dk), v (TB, Lk, Dv).
    q = q_ref[...]
    k = k_ref[...]
    v = v_ref[...]

    # Fold the 1/temperature scale into q (Lq*Dk elements instead of Lq*Lk).
    q_scaled = q * jnp.asarray(inv_temperature, q.dtype)

    # scores = q @ k^T, batched; the feature-dim contraction feeds the MXU
    # directly (no explicit K transpose), f32 accumulation.
    scores = jnp.einsum(
        "bqd,bkd->bqk", q_scaled, k, preferred_element_type=jnp.float32
    )  # (TB, Lq, Lk)

    # Numerically stable softmax over the last axis (torch Softmax(dim=2)).
    # Exact reciprocal: attn is a user-visible output, rows must sum to 1.
    m = jnp.max(scores, axis=-1, keepdims=True)
    e = jnp.exp(scores - m)
    denom = jnp.sum(e, axis=-1, keepdims=True)
    attn = e * pl.reciprocal(denom, approx=False)  # (TB, Lq, Lk), f32

    # output = attn @ v, batched, f32 accumulation.
    out = jnp.einsum(
        "bqk,bkd->bqd", attn.astype(v.dtype), v, preferred_element_type=jnp.float32
    )  # (TB, Lq, Dv)

    # Lane-dense packing: concatenate the TB batch tiles along the lane axis so
    # each store is TB*X lanes wide instead of TB masked sub-128 partial stores.
    out_packed = jnp.concatenate([out[t] for t in range(tb)], axis=-1)    # (Lq, TB*Dv)
    attn_packed = jnp.concatenate([attn[t] for t in range(tb)], axis=-1)  # (Lq, TB*Lk)

    out_ref[0] = out_packed.astype(out_ref.dtype)
    attn_ref[0] = attn_packed.astype(attn_ref.dtype)


def _tpu_vmem_capacity_bytes():
    """Physical VMEM per TensorCore (128 MiB on v5e/v6e, 64 MiB on v7x)."""
    try:
        return int(pltpu.get_tpu_info().vmem_capacity_bytes)
    except Exception:
        return 64 * 1024 * 1024  # conservative fallback (v7x per-TC size)


def _num_tensorcores_per_chip():
    """2 on v7x (so 'parallel' grid axes can be sharded across TCs), else 1."""
    try:
        kind = jax.devices()[0].device_kind.lower()
    except Exception:
        return 1
    return 2 if "v7" in kind else 1


def _working_set_bytes(tb, lq, lk, dk, dv, in_itemsize, out_itemsize):
    """VMEM working set for one grid step: double-buffered I/O blocks plus the
    f32 in-kernel temporaries Mosaic materializes (scores/e/attn, out acc, q*scale)."""
    io_in = 2 * in_itemsize * tb * (lq * dk + lk * dk + lk * dv)
    io_out = 2 * out_itemsize * tb * (lq * dv + lq * lk)
    f32_tmp = 4 * tb * (3 * lq * lk + 2 * lq * dv + lq * dk)
    return io_in + io_out + f32_tmp


def _choose_batch_tile(B, lq, lk, dk, dv, in_itemsize, out_itemsize,
                       vmem_budget, num_cores):
    """Largest divisor of B whose working set fits the budget.  Single-TC chips
    (v5e/v6e): biggest tile wins (ideally one grid step).  Multi-TC (v7x):
    prefer a tile that keeps the grid a multiple of num_cores."""
    divisors = [d for d in range(1, B + 1) if B % d == 0]
    fitting = [d for d in divisors
               if _working_set_bytes(d, lq, lk, dk, dv, in_itemsize, out_itemsize)
               <= vmem_budget]
    if not fitting:
        fitting = [1]
    tb = max(fitting)
    if num_cores >= 2:
        sharded = [d for d in fitting if (B // d) % num_cores == 0]
        if sharded:
            tb = max(sharded)
    return tb


def scaled_dot_product_attention(q, k, v, temperature, attn_dtype=None):
    """q: (B, Lq, Dk), k: (B, Lk, Dk), v: (B, Lk, Dv) -> (output, attn).

    attn_dtype: optional narrower dtype (e.g. jnp.bfloat16) for the returned attn
    matrix (halves the dominant HBM write on v5e once L grows).  Defaults to
    q.dtype to preserve the PyTorch module's semantics.
    """
    B, Lq, Dk = q.shape
    _, Lk, _ = k.shape
    Dv = v.shape[-1]

    out_dtype = q.dtype
    attn_dtype = jnp.dtype(out_dtype) if attn_dtype is None else jnp.dtype(attn_dtype)

    in_itemsize = jnp.dtype(q.dtype).itemsize
    out_itemsize = max(jnp.dtype(out_dtype).itemsize, jnp.dtype(attn_dtype).itemsize)

    vmem_cap = _tpu_vmem_capacity_bytes()
    num_cores = _num_tensorcores_per_chip()
    vmem_budget = int(0.45 * vmem_cap)  # ~57 MiB on v5e/v6e, ~28 MiB on v7x

    TB = _choose_batch_tile(B, Lq, Lk, Dk, Dv, in_itemsize, out_itemsize,
                            vmem_budget, num_cores)
    assert B % TB == 0
    G = B // TB

    ws = _working_set_bytes(TB, Lq, Lk, Dk, Dv, in_itemsize, out_itemsize)
    vmem_limit = int(max(32 * 1024 * 1024,
                         min(0.70 * vmem_cap, ws + 8 * 1024 * 1024)))

    kernel = functools.partial(
        _sdpa_kernel, inv_temperature=1.0 / float(temperature), tb=TB)

    # Lane-dense packed outputs: per grid step a (Lq, TB*X) slab.
    out_shapes = (
        jax.ShapeDtypeStruct((G, Lq, TB * Dv), out_dtype),
        jax.ShapeDtypeStruct((G, Lq, TB * Lk), attn_dtype),
    )

    grid_spec = pltpu.PrefetchScalarGridSpec(
        num_scalar_prefetch=0,
        grid=(G,),
        in_specs=[
            pl.BlockSpec((TB, Lq, Dk), lambda b: (b, 0, 0)),
            pl.BlockSpec((TB, Lk, Dk), lambda b: (b, 0, 0)),
            pl.BlockSpec((TB, Lk, Dv), lambda b: (b, 0, 0)),
        ],
        out_specs=[
            pl.BlockSpec((1, Lq, TB * Dv), lambda b: (b, 0, 0)),
            pl.BlockSpec((1, Lq, TB * Lk), lambda b: (b, 0, 0)),
        ],
    )

    out_p, attn_p = pl.pallas_call(
        kernel,
        out_shape=out_shapes,
        grid_spec=grid_spec,
        compiler_params=pltpu.CompilerParams(
            dimension_semantics=("parallel",),
            vmem_limit_bytes=vmem_limit,
        ),
    )(q, k, v)

    # Undo the lane packing (layout plumbing only; XLA-side reshape/transpose).
    out = out_p.reshape(G, Lq, TB, Dv).transpose(0, 2, 1, 3).reshape(B, Lq, Dv)
    attn = attn_p.reshape(G, Lq, TB, Lk).transpose(0, 2, 1, 3).reshape(B, Lq, Lk)
    return out, attn


def _reference(q, k, v, temperature):
    attn = jnp.einsum("bqd,bkd->bqk", q, k) / temperature
    attn = jax.nn.softmax(attn, axis=2)
    out = jnp.einsum("bqk,bkd->bqd", attn, v)
    return out, attn


if __name__ == "__main__":
    # Small shapes consistent with DSANet's self-attention usage.
    B, Lq, Lk, Dk, Dv = 4, 8, 8, 32, 32
    temperature = float(Dk) ** 0.5  # power(d_k, 0.5), as used in DSANet

    key = jax.random.PRNGKey(0)
    kq, kk, kv = jax.random.split(key, 3)
    q = jax.random.normal(kq, (B, Lq, Dk), dtype=jnp.float32)
    k = jax.random.normal(kk, (B, Lk, Dk), dtype=jnp.float32)
    v = jax.random.normal(kv, (B, Lk, Dv), dtype=jnp.float32)

    out, attn = scaled_dot_product_attention(q, k, v, temperature)
    jax.block_until_ready(out)
    jax.block_until_ready(attn)

    out_ref, attn_ref = _reference(q, k, v, temperature)
    # Exact-reciprocal softmax -> only residual differences are MXU vs XLA f32
    # matmul rounding; keep a small tolerance for that.
    assert jnp.allclose(attn, attn_ref, atol=1e-3, rtol=1e-3), "attn mismatch"
    assert jnp.allclose(out, out_ref, atol=1e-3, rtol=1e-3), "output mismatch"

    print("KERNEL_OK")
</pallas_src>

<mosaic_0001>
module attributes {stable_mosaic.version = 11 : i64} {
  func.func @_sdpa_kernel(%arg0: i32, %arg1: memref<4x8x32xf32, #tpu.memory_space<vmem>>, %arg2: memref<4x8x32xf32, #tpu.memory_space<vmem>>, %arg3: memref<4x8x32xf32, #tpu.memory_space<vmem>>, %arg4: memref<1x8x128xf32, #tpu.memory_space<vmem>>, %arg5: memref<1x8x32xf32, #tpu.memory_space<vmem>>) attributes {dimension_semantics = [#tpu.dimension_semantics<parallel>], iteration_bounds = array<i64: 1>, scalar_prefetch = 0 : i64, scratch_operands = 0 : i64, tpu.core_type = #tpu.core_type<tc>, window_params = [{transform_indices = @transform_0, window_bounds = array<i64: 4, 8, 32>}, {transform_indices = @transform_1, window_bounds = array<i64: 4, 8, 32>}, {transform_indices = @transform_2, window_bounds = array<i64: 4, 8, 32>}, {transform_indices = @transform_3, window_bounds = array<i64: 1, 8, 128>}, {transform_indices = @transform_4, window_bounds = array<i64: 1, 8, 32>}]} {
    %c0 = arith.constant 0 : index
    %c0_0 = arith.constant 0 : index
    %c0_1 = arith.constant 0 : index
    %0 = vector.load %arg1[%c0, %c0_0, %c0_1] : memref<4x8x32xf32, #tpu.memory_space<vmem>>, vector<4x8x32xf32>
    %c0_2 = arith.constant 0 : index
    %c0_3 = arith.constant 0 : index
    %c0_4 = arith.constant 0 : index
    %1 = vector.load %arg2[%c0_2, %c0_3, %c0_4] : memref<4x8x32xf32, #tpu.memory_space<vmem>>, vector<4x8x32xf32>
    %c0_5 = arith.constant 0 : index
    %c0_6 = arith.constant 0 : index
    %c0_7 = arith.constant 0 : index
    %2 = vector.load %arg3[%c0_5, %c0_6, %c0_7] : memref<4x8x32xf32, #tpu.memory_space<vmem>>, vector<4x8x32xf32>
    %cst = arith.constant 0.176776692 : f32
    %3 = vector.broadcast %cst : f32 to vector<4x8x32xf32>
    %4 = arith.mulf %0, %3 : vector<4x8x32xf32>
    "tpu.trace_start"() <{level = 10 : i32, message = "bqd,bkd->bqk"}> : () -> ()
    %cst_8 = arith.constant dense<0.000000e+00> : vector<4x8x8xf32>
    %5 = tpu.matmul %4, %1, %cst_8 {dimension_numbers = #tpu.dot_dimension_numbers<[2], [2], [1], [1], [0, 0, 0, 1, 1, 1], [0], [0]>} : vector<4x8x32xf32>, vector<4x8x32xf32>, vector<4x8x8xf32> -> vector<4x8x8xf32>
    "tpu.trace_stop"() : () -> ()
    %cst_9 = arith.constant dense<0xFF800000> : vector<4x8xf32>
    %6 = vector.multi_reduction <maximumf>, %5, %cst_9 [2] : vector<4x8x8xf32> to vector<4x8xf32>
    %7 = vector.shape_cast %6 : vector<4x8xf32> to vector<4x8x1xf32>
    %8 = vector.broadcast %7 : vector<4x8x1xf32> to vector<4x8x8xf32>
    %9 = arith.subf %5, %8 : vector<4x8x8xf32>
    %10 = math.exp %9 : vector<4x8x8xf32>
    %cst_10 = arith.constant dense<0.000000e+00> : vector<4x8xf32>
    %11 = vector.multi_reduction <add>, %10, %cst_10 [2] : vector<4x8x8xf32> to vector<4x8xf32>
    %12 = vector.shape_cast %11 : vector<4x8xf32> to vector<4x8x1xf32>
    %13 = tpu.reciprocal %12 : vector<4x8x1xf32> -> vector<4x8x1xf32>
    %14 = vector.broadcast %13 : vector<4x8x1xf32> to vector<4x8x8xf32>
    %15 = arith.mulf %10, %14 : vector<4x8x8xf32>
    "tpu.trace_start"() <{level = 10 : i32, message = "bqk,bkd->bqd"}> : () -> ()
    %cst_11 = arith.constant dense<0.000000e+00> : vector<4x8x32xf32>
    %16 = tpu.matmul %15, %2, %cst_11 {dimension_numbers = #tpu.dot_dimension_numbers<[2], [1], [1], [2], [0, 0, 0, 1, 1, 2], [0], [0]>} : vector<4x8x8xf32>, vector<4x8x32xf32>, vector<4x8x32xf32> -> vector<4x8x32xf32>
    "tpu.trace_stop"() : () -> ()
    %17 = vector.extract_strided_slice %16 {offsets = [0, 0, 0], sizes = [1, 8, 32], strides = [1, 1, 1]} : vector<4x8x32xf32> to vector<1x8x32xf32>
    %18 = vector.shape_cast %17 : vector<1x8x32xf32> to vector<8x32xf32>
    %19 = vector.extract_strided_slice %16 {offsets = [1, 0, 0], sizes = [1, 8, 32], strides = [1, 1, 1]} : vector<4x8x32xf32> to vector<1x8x32xf32>
    %20 = vector.shape_cast %19 : vector<1x8x32xf32> to vector<8x32xf32>
    %21 = vector.extract_strided_slice %16 {offsets = [2, 0, 0], sizes = [1, 8, 32], strides = [1, 1, 1]} : vector<4x8x32xf32> to vector<1x8x32xf32>
    %22 = vector.shape_cast %21 : vector<1x8x32xf32> to vector<8x32xf32>
    %23 = vector.extract_strided_slice %16 {offsets = [3, 0, 0], sizes = [1, 8, 32], strides = [1, 1, 1]} : vector<4x8x32xf32> to vector<1x8x32xf32>
    %24 = vector.shape_cast %23 : vector<1x8x32xf32> to vector<8x32xf32>
    %25 = tpu.concatenate %18, %20, %22, %24 in 1 : vector<8x32xf32>, vector<8x32xf32>, vector<8x32xf32>, vector<8x32xf32> -> vector<8x128xf32>
    %26 = vector.extract_strided_slice %15 {offsets = [0, 0, 0], sizes = [1, 8, 8], strides = [1, 1, 1]} : vector<4x8x8xf32> to vector<1x8x8xf32>
    %27 = vector.shape_cast %26 : vector<1x8x8xf32> to vector<8x8xf32>
    %28 = vector.extract_strided_slice %15 {offsets = [1, 0, 0], sizes = [1, 8, 8], strides = [1, 1, 1]} : vector<4x8x8xf32> to vector<1x8x8xf32>
    %29 = vector.shape_cast %28 : vector<1x8x8xf32> to vector<8x8xf32>
    %30 = vector.extract_strided_slice %15 {offsets = [2, 0, 0], sizes = [1, 8, 8], strides = [1, 1, 1]} : vector<4x8x8xf32> to vector<1x8x8xf32>
    %31 = vector.shape_cast %30 : vector<1x8x8xf32> to vector<8x8xf32>
    %32 = vector.extract_strided_slice %15 {offsets = [3, 0, 0], sizes = [1, 8, 8], strides = [1, 1, 1]} : vector<4x8x8xf32> to vector<1x8x8xf32>
    %33 = vector.shape_cast %32 : vector<1x8x8xf32> to vector<8x8xf32>
    %34 = tpu.concatenate %27, %29, %31, %33 in 1 : vector<8x8xf32>, vector<8x8xf32>, vector<8x8xf32>, vector<8x8xf32> -> vector<8x32xf32>
    %c0_12 = arith.constant 0 : index
    %c0_13 = arith.constant 0 : index
    %c0_14 = arith.constant 0 : index
    %35 = vector.load %arg4[%c0_12, %c0_13, %c0_14] : memref<1x8x128xf32, #tpu.memory_space<vmem>>, vector<1x8x128xf32>
    %36 = vector.shape_cast %35 : vector<1x8x128xf32> to vector<8x128xf32>
    %37 = vector.shape_cast %25 : vector<8x128xf32> to vector<1x8x128xf32>
    tpu.vector_store %arg4[%c0_12, %c0_13, %c0_14], %37 {strides = array<i32>} : memref<1x8x128xf32, #tpu.memory_space<vmem>>, vector<1x8x128xf32>,
    %c0_15 = arith.constant 0 : index
    %c0_16 = arith.constant 0 : index
    %c0_17 = arith.constant 0 : index
    %38 = vector.load %arg5[%c0_15, %c0_16, %c0_17] : memref<1x8x32xf32, #tpu.memory_space<vmem>>, vector<1x8x32xf32>
    %39 = vector.shape_cast %38 : vector<1x8x32xf32> to vector<8x32xf32>
    %40 = vector.shape_cast %34 : vector<8x32xf32> to vector<1x8x32xf32>
    tpu.vector_store %arg5[%c0_15, %c0_16, %c0_17], %40 {strides = array<i32>} : memref<1x8x32xf32, #tpu.memory_space<vmem>>, vector<1x8x32xf32>,
    return
  }
  func.func @transform_0(%arg0: i32) -> (i32, i32, i32) {
    %c0_i32 = arith.constant 0 : i32
    %c0_i32_0 = arith.constant 0 : i32
    %c0_i32_1 = arith.constant 0 : i32
    return %arg0, %c0_i32, %c0_i32_0 : i32, i32, i32
  }
  func.func @transform_1(%arg0: i32) -> (i32, i32, i32) {
    %c0_i32 = arith.constant 0 : i32
    %c0_i32_0 = arith.constant 0 : i32
    %c0_i32_1 = arith.constant 0 : i32
    return %arg0, %c0_i32, %c0_i32_0 : i32, i32, i32
  }
  func.func @transform_2(%arg0: i32) -> (i32, i32, i32) {
    %c0_i32 = arith.constant 0 : i32
    %c0_i32_0 = arith.constant 0 : i32
    %c0_i32_1 = arith.constant 0 : i32
    return %arg0, %c0_i32, %c0_i32_0 : i32, i32, i32
  }
  func.func @transform_3(%arg0: i32) -> (i32, i32, i32) {
    %c0_i32 = arith.constant 0 : i32
    %c0_i32_0 = arith.constant 0 : i32
    %c0_i32_1 = arith.constant 0 : i32
    return %arg0, %c0_i32, %c0_i32_0 : i32, i32, i32
  }
  func.func @transform_4(%arg0: i32) -> (i32, i32, i32) {
    %c0_i32 = arith.constant 0 : i32
    %c0_i32_0 = arith.constant 0 : i32
    %c0_i32_1 = arith.constant 0 : i32
    return %arg0, %c0_i32, %c0_i32_0 : i32, i32, i32
  }
}

</mosaic_0001>

<llo_original>
// kernel: tpu_custom_call.1
$region0: #{tpu_custom_call.1}
  #allocation0 [shape = 'u32[]', space=smem, size = 0x4, offset = 0x4, fixed_abs, tag = 'smem constant byte address 0x4 - core index']
  #allocation1 [shape = 'u32[144,128]{1,0:T(1,128)}', space=vmem, size = 0x12000, scoped, tag = 'internal scratch']
  %s0 = inlined_call_operand.hbm [shape: f32[4,8,32], index: 0, kind: input, shape index: {}]
  %s1 = inlined_call_operand.hbm [shape: f32[4,8,32], index: 1, kind: input, shape index: {}]
  %s2 = inlined_call_operand.hbm [shape: f32[4,8,32], index: 2, kind: input, shape index: {}]
  %s3 = inlined_call_operand.hbm [shape: f32[1,8,128], index: 3, kind: output, shape index: {0}]
  %s4 = inlined_call_operand.hbm [shape: f32[1,8,32], index: 4, kind: output, shape index: {1}]
  %5 = xla_tuple %s3, %s4
  %s6 = sld [smem:[#allocation0]]
  $region42: #{tpu_custom_call.1} parent=0
    _
  %s8 = ssub.s32 1, %s6
  %s9 = scalar_select 0, %s8, %s6
  $region1: #{tpu_custom_call.1} parent=0
    #allocation2 [shape = 'u8[16384]{0}', space=vmem, size = 0x4000, scoped, tag = 'input window, operand 0, single buffered']
    #allocation3 [shape = 's32[1]{0}', space=sflag, size = 0x4, scoped, tag = 'scoped memory for tpu_custom_call.1']
    #allocation4 [shape = 's32[1]{0}', space=sflag, size = 0x4, scoped, tag = 'scoped memory for tpu_custom_call.1']
    #allocation5 [shape = 'u8[16384]{0}', space=vmem, size = 0x4000, scoped, tag = 'input window, operand 1, single buffered']
    #allocation6 [shape = 's32[1]{0}', space=sflag, size = 0x4, scoped, tag = 'scoped memory for tpu_custom_call.1']
    #allocation7 [shape = 'u8[16384]{0}', space=vmem, size = 0x4000, scoped, tag = 'input window, operand 2, single buffered']
    #allocation8 [shape = 'u8[4096]{0}', space=vmem, size = 0x1000, scoped, tag = 'output window, operand 0, single buffered']
    #allocation9 [shape = 'u8[4096]{0}', space=vmem, size = 0x1000, scoped, tag = 'output window, operand 1, single buffered']
    #allocation10 [shape = 's32[1]{0}', space=sflag, size = 0x4, scoped, tag = 'scoped memory for tpu_custom_call.1']
    %10 = vsyncpa [#allocation3], 0
    %11 = vsyncpa [#allocation6], 0
    %12 = vsyncpa [#allocation4], 0
    %13 = vsyncpa [#allocation10], 0
    // Predicated region
    $region2: #{tpu_custom_call.1} parent=1 // pred_check
      _
    $region3: #{tpu_custom_call.1} parent=1 // pred_check_branch
      %15 = sbr.rel (0) target = $region5
    $region4: #{tpu_custom_call.1} parent=1 // pred_region
      %s17 = ssub.s32 512, 512
      %18 = vsyncadd [#allocation3], %s17
      %s19 = sshll.u32 [#allocation2], 4
      %s20 = int_to_ptr.vmem [resolvable:$true] %s19
      %25 = dma.hbm_to_vmem [thread:$0]  %s0, 512, %s20, [#allocation3], 128, 128, 8
    $region5: #{tpu_custom_call.1} parent=1 // pred_fallthru
      _
    // Predicated region
    $region6: #{tpu_custom_call.1} parent=1 // pred_check
      _
    $region7: #{tpu_custom_call.1} parent=1 // pred_check_branch
      %27 = sbr.rel (0) target = $region9
    $region8: #{tpu_custom_call.1} parent=1 // pred_region
      %s29 = ssub.s32 512, 512
      %30 = vsyncadd [#allocation6], %s29
      %s31 = sshll.u32 [#allocation5], 4
      %s32 = int_to_ptr.vmem [resolvable:$true] %s31
      %37 = dma.hbm_to_vmem [thread:$0]  %s1, 512, %s32, [#allocation6], 128, 128, 8
    $region9: #{tpu_custom_call.1} parent=1 // pred_fallthru
      _
    // Predicated region
    $region10: #{tpu_custom_call.1} parent=1 // pred_check
      _
    $region11: #{tpu_custom_call.1} parent=1 // pred_check_branch
      %39 = sbr.rel (0) target = $region13
    $region12: #{tpu_custom_call.1} parent=1 // pred_region
      %s41 = ssub.s32 512, 512
      %42 = vsyncadd [#allocation6], %s41
      %s43 = sshll.u32 [#allocation7], 4
      %s44 = int_to_ptr.vmem [resolvable:$true] %s43
      %49 = dma.hbm_to_vmem [thread:$0]  %s2, 512, %s44, [#allocation6], 128, 128, 8
    $region13: #{tpu_custom_call.1} parent=1 // pred_fallthru
      _
    // Predicated region
    $region14: #{tpu_custom_call.1} parent=1 // pred_check
      _
    $region15: #{tpu_custom_call.1} parent=1 // pred_check_branch
      %51 = sbr.rel (0) target = $region17
    $region16: #{tpu_custom_call.1} parent=1 // pred_region
      %52 = dma.done [#allocation3], 512
    $region17: #{tpu_custom_call.1} parent=1 // pred_fallthru
      _
    // Predicated region
    $region18: #{tpu_custom_call.1} parent=1 // pred_check
      _
    $region19: #{tpu_custom_call.1} parent=1 // pred_check_branch
      %54 = sbr.rel (0) target = $region21
    $region20: #{tpu_custom_call.1} parent=1 // pred_region
      %55 = dma.done [#allocation6], 512
    $region21: #{tpu_custom_call.1} parent=1 // pred_fallthru
      _
    // Predicated region
    $region22: #{tpu_custom_call.1} parent=1 // pred_check
      _
    $region23: #{tpu_custom_call.1} parent=1 // pred_check_branch
      %57 = sbr.rel (0) target = $region25
    $region24: #{tpu_custom_call.1} parent=1 // pred_region
      %58 = dma.done [#allocation6], 512
    $region25: #{tpu_custom_call.1} parent=1 // pred_fallthru
      _
    %v59 = vld [vmem:[#allocation2] sm:$0xff]
    %v60 = vld [vmem:[#allocation2 + $0x8] sm:$0xff]
    %v61 = vld [vmem:[#allocation2 + $0x10] sm:$0xff]
    %v62 = vld [vmem:[#allocation2 + $0x18] sm:$0xff]
    %v63 = vld [vmem:[#allocation5] sm:$0xff]
    %v64 = vld [vmem:[#allocation5 + $0x8] sm:$0xff]
    %v65 = vld [vmem:[#allocation5 + $0x10] sm:$0xff]
    %v66 = vld [vmem:[#allocation5 + $0x18] sm:$0xff]
    %v67 = vld [vmem:[#allocation7] sm:$0xff]
    %v68 = vld [vmem:[#allocation7 + $0x8] sm:$0xff]
    %v69 = vld [vmem:[#allocation7 + $0x10] sm:$0xff]
    %v70 = vld [vmem:[#allocation7 + $0x18] sm:$0xff]
    %v71 = vmul.f32 %v59, 0.17677669
    %v72 = vmul.f32 %v60, 0.17677669
    %v73 = vmul.f32 %v61, 0.17677669
    %v74 = vmul.f32 %v62, 0.17677669
    %vm75 = vcmask 261120
    %v77 = vsel %vm75, %v71, 0
    %v80 = vsel %vm75, %v63, 0
    %82 = vmatprep.subr.mxu0 0.0
    %83 = vmatpush1.xpose.msra.mxu0 %v80
    %84 = vmatprep.subr.mxu0 0.0
    %85 = vmatpush1.xpose.msra.mxu0 0.0
    %86 = vmatprep.subr.mxu0 0.0
    %87 = vmatpush1.xpose.msra.mxu0 0.0
    %88 = vmatprep.subr.mxu0 0.0
    %89 = vmatpush1.xpose.msra.mxu0 0.0
    %90 = vmatprep.subr.mxu0 0.0
    %91 = vmatpush1.xpose.msra.mxu0 0.0
    %92 = vmatprep.subr.mxu0 0.0
    %93 = vmatpush1.xpose.msra.mxu0 0.0
    %94 = vmatprep.subr.mxu0 0.0
    %95 = vmatpush1.xpose.msra.mxu0 0.0
    %96 = vmatprep.subr.mxu0 0.0
    %97 = vmatpush1.xpose.msra.mxu0 0.0
    %98 = vmatprep.subr.mxu0 0.0
    %99 = vmatpush1.xpose.msra.mxu0 0.0
    %100 = vmatprep.subr.mxu0 0.0
    %101 = vmatpush1.xpose.msra.mxu0 0.0
    %102 = vmatprep.subr.mxu0 0.0
    %103 = vmatpush1.xpose.msra.mxu0 0.0
    %104 = vmatprep.subr.mxu0 0.0
    %105 = vmatpush1.xpose.msra.mxu0 0.0
    %106 = vmatprep.subr.mxu0 0.0
    %107 = vmatpush1.xpose.msra.mxu0 0.0
    %108 = vmatprep.subr.mxu0 0.0
    %109 = vmatpush1.xpose.msra.mxu0 0.0
    %110 = vmatprep.subr.mxu0 0.0
    %111 = vmatpush1.xpose.msra.mxu0 0.0
    %112 = vmatprep.subr.mxu0 0.0
    %113 = vmatpush1.xpose.msra.mxu0 0.0
    %114 = vmatprep.subr.mxu0 0.0
    %115 = vmatpush1.xpose.msra.mxu0 0.0
    %116 = vmatprep.subr.mxu0 0.0
    %117 = vmatpush1.xpose.msra.mxu0 0.0
    %118 = vmatprep.subr.mxu0 0.0
    %119 = vmatpush1.xpose.msra.mxu0 0.0
    %120 = vmatprep.subr.mxu0 0.0
    %121 = vmatpush1.xpose.msra.mxu0 0.0
    %122 = vmatprep.subr.mxu0 0.0
    %123 = vmatpush1.xpose.msra.mxu0 0.0
    %124 = vmatprep.subr.mxu0 0.0
    %125 = vmatpush1.xpose.msra.mxu0 0.0
    %126 = vmatprep.subr.mxu0 0.0
    %127 = vmatpush1.xpose.msra.mxu0 0.0
    %128 = vmatprep.subr.mxu0 0.0
    %129 = vmatpush1.xpose.msra.mxu0 0.0
    %130 = vmatprep.subr.mxu0 0.0
    %131 = vmatpush1.xpose.msra.mxu0 0.0
    %132 = vmatprep.subr.mxu0 0.0
    %133 = vmatpush1.xpose.msra.mxu0 0.0
    %134 = vmatprep.subr.mxu0 0.0
    %135 = vmatpush1.xpose.msra.mxu0 0.0
    %136 = vmatprep.subr.mxu0 0.0
    %137 = vmatpush1.xpose.msra.mxu0 0.0
    %138 = vmatprep.subr.mxu0 0.0
    %139 = vmatpush1.xpose.msra.mxu0 0.0
    %140 = vmatprep.subr.mxu0 0.0
    %141 = vmatpush1.xpose.msra.mxu0 0.0
    %142 = vmatprep.subr.mxu0 0.0
    %143 = vmatpush1.xpose.msra.mxu0 0.0
    %144 = vmatprep.subr.mxu0 0.0
    %145 = vmatpush1.xpose.msra.mxu0 0.0
    %146 = vmatprep.mubr.f32.mxu0 0.0
    %147 = vmatmul.mubr.f32.gmra.mrb[0].mxu0 %v77
    %v148 = vpop.f32.mrb[0].mxu0
    %v149 = vadd.f32 0.0, %v148
    %v150 = vpop.f32.mrb[0].mxu0
    %151 = vdwg.mxu0
    %v153 = vsel %vm75, %v72, 0
    %v156 = vsel %vm75, %v64, 0
    %158 = vmatprep.subr.mxu0 0.0
    %159 = vmatpush1.xpose.msra.mxu0 %v156
    %160 = vmatprep.subr.mxu0 0.0
    %161 = vmatpush1.xpose.msra.mxu0 0.0
    %162 = vmatprep.subr.mxu0 0.0
    %163 = vmatpush1.xpose.msra.mxu0 0.0
    %164 = vmatprep.subr.mxu0 0.0
    %165 = vmatpush1.xpose.msra.mxu0 0.0
    %166 = vmatprep.subr.mxu0 0.0
    %167 = vmatpush1.xpose.msra.mxu0 0.0
    %168 = vmatprep.subr.mxu0 0.0
    %169 = vmatpush1.xpose.msra.mxu0 0.0
    %170 = vmatprep.subr.mxu0 0.0
    %171 = vmatpush1.xpose.msra.mxu0 0.0
    %172 = vmatprep.subr.mxu0 0.0
    %173 = vmatpush1.xpose.msra.mxu0 0.0
    %174 = vmatprep.subr.mxu0 0.0
    %175 = vmatpush1.xpose.msra.mxu0 0.0
    %176 = vmatprep.subr.mxu0 0.0
    %177 = vmatpush1.xpose.msra.mxu0 0.0
    %178 = vmatprep.subr.mxu0 0.0
    %179 = vmatpush1.xpose.msra.mxu0 0.0
    %180 = vmatprep.subr.mxu0 0.0
    %181 = vmatpush1.xpose.msra.mxu0 0.0
    %182 = vmatprep.subr.mxu0 0.0
    %183 = vmatpush1.xpose.msra.mxu0 0.0
    %184 = vmatprep.subr.mxu0 0.0
    %185 = vmatpush1.xpose.msra.mxu0 0.0
    %186 = vmatprep.subr.mxu0 0.0
    %187 = vmatpush1.xpose.msra.mxu0 0.0
    %188 = vmatprep.subr.mxu0 0.0
    %189 = vmatpush1.xpose.msra.mxu0 0.0
    %190 = vmatprep.subr.mxu0 0.0
    %191 = vmatpush1.xpose.msra.mxu0 0.0
    %192 = vmatprep.subr.mxu0 0.0
    %193 = vmatpush1.xpose.msra.mxu0 0.0
    %194 = vmatprep.subr.mxu0 0.0
    %195 = vmatpush1.xpose.msra.mxu0 0.0
    %196 = vmatprep.subr.mxu0 0.0
    %197 = vmatpush1.xpose.msra.mxu0 0.0
    %198 = vmatprep.subr.mxu0 0.0
    %199 = vmatpush1.xpose.msra.mxu0 0.0
    %200 = vmatprep.subr.mxu0 0.0
    %201 = vmatpush1.xpose.msra.mxu0 0.0
    %202 = vmatprep.subr.mxu0 0.0
    %203 = vmatpush1.xpose.msra.mxu0 0.0
    %204 = vmatprep.subr.mxu0 0.0
    %205 = vmatpush1.xpose.msra.mxu0 0.0
    %206 = vmatprep.subr.mxu0 0.0
    %207 = vmatpush1.xpose.msra.mxu0 0.0
    %208 = vmatprep.subr.mxu0 0.0
    %209 = vmatpush1.xpose.msra.mxu0 0.0
    %210 = vmatprep.subr.mxu0 0.0
    %211 = vmatpush1.xpose.msra.mxu0 0.0
    %212 = vmatprep.subr.mxu0 0.0
    %213 = vmatpush1.xpose.msra.mxu0 0.0
    %214 = vmatprep.subr.mxu0 0.0
    %215 = vmatpush1.xpose.msra.mxu0 0.0
    %216 = vmatprep.subr.mxu0 0.0
    %217 = vmatpush1.xpose.msra.mxu0 0.0
    %218 = vmatprep.subr.mxu0 0.0
    %219 = vmatpush1.xpose.msra.mxu0 0.0
    %220 = vmatprep.subr.mxu0 0.0
    %221 = vmatpush1.xpose.msra.mxu0 0.0
    %222 = vmatprep.mubr.f32.mxu0 0.0
    %223 = vmatmul.mubr.f32.gmra.mrb[0].mxu0 %v153
    %v224 = vpop.f32.mrb[0].mxu0
    %v225 = vadd.f32 0.0, %v224
    %v226 = vpop.f32.mrb[0].mxu0
    %227 = vdwg.mxu0
    %v229 = vsel %vm75, %v73, 0
    %v232 = vsel %vm75, %v65, 0
    %234 = vmatprep.subr.mxu0 0.0
    %235 = vmatpush1.xpose.msra.mxu0 %v232
    %236 = vmatprep.subr.mxu0 0.0
    %237 = vmatpush1.xpose.msra.mxu0 0.0
    %238 = vmatprep.subr.mxu0 0.0
    %239 = vmatpush1.xpose.msra.mxu0 0.0
    %240 = vmatprep.subr.mxu0 0.0
    %241 = vmatpush1.xpose.msra.mxu0 0.0
    %242 = vmatprep.subr.mxu0 0.0
    %243 = vmatpush1.xpose.msra.mxu0 0.0
    %244 = vmatprep.subr.mxu0 0.0
    %245 = vmatpush1.xpose.msra.mxu0 0.0
    %246 = vmatprep.subr.mxu0 0.0
    %247 = vmatpush1.xpose.msra.mxu0 0.0
    %248 = vmatprep.subr.mxu0 0.0
    %249 = vmatpush1.xpose.msra.mxu0 0.0
    %250 = vmatprep.subr.mxu0 0.0
    %251 = vmatpush1.xpose.msra.mxu0 0.0
    %252 = vmatprep.subr.mxu0 0.0
    %253 = vmatpush1.xpose.msra.mxu0 0.0
    %254 = vmatprep.subr.mxu0 0.0
    %255 = vmatpush1.xpose.msra.mxu0 0.0
    %256 = vmatprep.subr.mxu0 0.0
    %257 = vmatpush1.xpose.msra.mxu0 0.0
    %258 = vmatprep.subr.mxu0 0.0
    %259 = vmatpush1.xpose.msra.mxu0 0.0
    %260 = vmatprep.subr.mxu0 0.0
    %261 = vmatpush1.xpose.msra.mxu0 0.0
    %262 = vmatprep.subr.mxu0 0.0
    %263 = vmatpush1.xpose.msra.mxu0 0.0
    %264 = vmatprep.subr.mxu0 0.0
    %265 = vmatpush1.xpose.msra.mxu0 0.0
    %266 = vmatprep.subr.mxu0 0.0
    %267 = vmatpush1.xpose.msra.mxu0 0.0
    %268 = vmatprep.subr.mxu0 0.0
    %269 = vmatpush1.xpose.msra.mxu0 0.0
    %270 = vmatprep.subr.mxu0 0.0
    %271 = vmatpush1.xpose.msra.mxu0 0.0
    %272 = vmatprep.subr.mxu0 0.0
    %273 = vmatpush1.xpose.msra.mxu0 0.0
    %274 = vmatprep.subr.mxu0 0.0
    %275 = vmatpush1.xpose.msra.mxu0 0.0
    %276 = vmatprep.subr.mxu0 0.0
    %277 = vmatpush1.xpose.msra.mxu0 0.0
    %278 = vmatprep.subr.mxu0 0.0
    %279 = vmatpush1.xpose.msra.mxu0 0.0
    %280 = vmatprep.subr.mxu0 0.0
    %281 = vmatpush1.xpose.msra.mxu0 0.0
    %282 = vmatprep.subr.mxu0 0.0
    %283 = vmatpush1.xpose.msra.mxu0 0.0
    %284 = vmatprep.subr.mxu0 0.0
    %285 = vmatpush1.xpose.msra.mxu0 0.0
    %286 = vmatprep.subr.mxu0 0.0
    %287 = vmatpush1.xpose.msra.mxu0 0.0
    %288 = vmatprep.subr.mxu0 0.0
    %289 = vmatpush1.xpose.msra.mxu0 0.0
    %290 = vmatprep.subr.mxu0 0.0
    %291 = vmatpush1.xpose.msra.mxu0 0.0
    %292 = vmatprep.subr.mxu0 0.0
    %293 = vmatpush1.xpose.msra.mxu0 0.0
    %294 = vmatprep.subr.mxu0 0.0
    %295 = vmatpush1.xpose.msra.mxu0 0.0
    %296 = vmatprep.subr.mxu0 0.0
    %297 = vmatpush1.xpose.msra.mxu0 0.0
    %298 = vmatprep.mubr.f32.mxu0 0.0
    %299 = vmatmul.mubr.f32.gmra.mrb[0].mxu0 %v229
    %v300 = vpop.f32.mrb[0].mxu0
    %v301 = vadd.f32 0.0, %v300
    %v302 = vpop.f32.mrb[0].mxu0
    %303 = vdwg.mxu0
    %v305 = vsel %vm75, %v74, 0
    %v308 = vsel %vm75, %v66, 0
    %310 = vmatprep.subr.mxu0 0.0
    %311 = vmatpush1.xpose.msra.mxu0 %v308
    %312 = vmatprep.subr.mxu0 0.0
    %313 = vmatpush1.xpose.msra.mxu0 0.0
    %314 = vmatprep.subr.mxu0 0.0
    %315 = vmatpush1.xpose.msra.mxu0 0.0
    %316 = vmatprep.subr.mxu0 0.0
    %317 = vmatpush1.xpose.msra.mxu0 0.0
    %318 = vmatprep.subr.mxu0 0.0
    %319 = vmatpush1.xpose.msra.mxu0 0.0
    %320 = vmatprep.subr.mxu0 0.0
    %321 = vmatpush1.xpose.msra.mxu0 0.0
    %322 = vmatprep.subr.mxu0 0.0
    %323 = vmatpush1.xpose.msra.mxu0 0.0
    %324 = vmatprep.subr.mxu0 0.0
    %325 = vmatpush1.xpose.msra.mxu0 0.0
    %326 = vmatprep.subr.mxu0 0.0
    %327 = vmatpush1.xpose.msra.mxu0 0.0
    %328 = vmatprep.subr.mxu0 0.0
    %329 = vmatpush1.xpose.msra.mxu0 0.0
    %330 = vmatprep.subr.mxu0 0.0
    %331 = vmatpush1.xpose.msra.mxu0 0.0
    %332 = vmatprep.subr.mxu0 0.0
    %333 = vmatpush1.xpose.msra.mxu0 0.0
    %334 = vmatprep.subr.mxu0 0.0
    %335 = vmatpush1.xpose.msra.mxu0 0.0
    %336 = vmatprep.subr.mxu0 0.0
    %337 = vmatpush1.xpose.msra.mxu0 0.0
    %338 = vmatprep.subr.mxu0 0.0
    %339 = vmatpush1.xpose.msra.mxu0 0.0
    %340 = vmatprep.subr.mxu0 0.0
    %341 = vmatpush1.xpose.msra.mxu0 0.0
    %342 = vmatprep.subr.mxu0 0.0
    %343 = vmatpush1.xpose.msra.mxu0 0.0
    %344 = vmatprep.subr.mxu0 0.0
    %345 = vmatpush1.xpose.msra.mxu0 0.0
    %346 = vmatprep.subr.mxu0 0.0
    %347 = vmatpush1.xpose.msra.mxu0 0.0
    %348 = vmatprep.subr.mxu0 0.0
    %349 = vmatpush1.xpose.msra.mxu0 0.0
    %350 = vmatprep.subr.mxu0 0.0
    %351 = vmatpush1.xpose.msra.mxu0 0.0
    %352 = vmatprep.subr.mxu0 0.0
    %353 = vmatpush1.xpose.msra.mxu0 0.0
    %354 = vmatprep.subr.mxu0 0.0
    %355 = vmatpush1.xpose.msra.mxu0 0.0
    %356 = vmatprep.subr.mxu0 0.0
    %357 = vmatpush1.xpose.msra.mxu0 0.0
    %358 = vmatprep.subr.mxu0 0.0
    %359 = vmatpush1.xpose.msra.mxu0 0.0
    %360 = vmatprep.subr.mxu0 0.0
    %361 = vmatpush1.xpose.msra.mxu0 0.0
    %362 = vmatprep.subr.mxu0 0.0
    %363 = vmatpush1.xpose.msra.mxu0 0.0
    %364 = vmatprep.subr.mxu0 0.0
    %365 = vmatpush1.xpose.msra.mxu0 0.0
    %366 = vmatprep.subr.mxu0 0.0
    %367 = vmatpush1.xpose.msra.mxu0 0.0
    %368 = vmatprep.subr.mxu0 0.0
    %369 = vmatpush1.xpose.msra.mxu0 0.0
    %370 = vmatprep.subr.mxu0 0.0
    %371 = vmatpush1.xpose.msra.mxu0 0.0
    %372 = vmatprep.subr.mxu0 0.0
    %373 = vmatpush1.xpose.msra.mxu0 0.0
    %374 = vmatprep.mubr.f32.mxu0 0.0
    %375 = vmatmul.mubr.f32.gmra.mrb[0].mxu0 %v305
    %v376 = vpop.f32.mrb[0].mxu0
    %v377 = vadd.f32 0.0, %v376
    %v378 = vpop.f32.mrb[0].mxu0
    %379 = vdwg.mxu0
    %vm380 = vcmask 64512
    %v381 = vsel %vm380, %v149, -inf
    %382 = vmax.xlane.f32.xlu0 %v381
    %v383 = vpop.xlane.xlu0 %382
    %v384 = vsel %vm380, %v225, -inf
    %385 = vmax.xlane.f32.xlu0 %v384
    %v386 = vpop.xlane.xlu0 %385
    %v387 = vsel %vm380, %v301, -inf
    %388 = vmax.xlane.f32.xlu0 %v387
    %v389 = vpop.xlane.xlu0 %388
    %v390 = vsel %vm380, %v377, -inf
    %391 = vmax.xlane.f32.xlu0 %v390
    %v392 = vpop.xlane.xlu0 %391
    %v393 = vsub.f32 %v149, %v383
    %v394 = vsub.f32 %v225, %v386
    %v395 = vsub.f32 %v301, %v389
    %v396 = vsub.f32 %v377, %v392
    %v397 = vmul.f32 %v393, 1.442695
    %v398 = vpow.pop %v397
    %v399 = vmul.f32 %v394, 1.442695
    %v400 = vpow.pop %v399
    %v401 = vmul.f32 %v395, 1.442695
    %v402 = vpow.pop %v401
    %v403 = vmul.f32 %v396, 1.442695
    %v404 = vpow.pop %v403
    %v405 = vsel %vm380, %v398, 0.0
    %406 = vadd.xlane.f32.xlu0 %v405
    %v407 = vpop.xlane.xlu0 %406
    %v408 = vsel %vm380, %v400, 0.0
    %409 = vadd.xlane.f32.xlu0 %v408
    %v410 = vpop.xlane.xlu0 %409
    %v411 = vsel %vm380, %v402, 0.0
    %412 = vadd.xlane.f32.xlu0 %v411
    %v413 = vpop.xlane.xlu0 %412
    %v414 = vsel %vm380, %v404, 0.0
    %415 = vadd.xlane.f32.xlu0 %v414
    %v416 = vpop.xlane.xlu0 %415
    %v417 = vrcp.pop %v407
    %v418 = vrcp.pop %v410
    %v419 = vrcp.pop %v413
    %v420 = vrcp.pop %v416
    %v421 = vmul.f32 %v398, %v417
    %v422 = vmul.f32 %v400, %v418
    %v423 = vmul.f32 %v402, %v419
    %v424 = vmul.f32 %v404, %v420
    %v426 = vsel %vm380, %v421, 0
    %428 = vmatprep.subr.mxu0 0.0
    %429 = vmatpush1.msra.mxu0 %v67
    %430 = vmatprep.subr.mxu0 0.0
    %431 = vmatpush1.msra.mxu0 0.0
    %432 = vmatprep.subr.mxu0 0.0
    %433 = vmatpush1.msra.mxu0 0.0
    %434 = vmatprep.subr.mxu0 0.0
    %435 = vmatpush1.msra.mxu0 0.0
    %436 = vmatprep.subr.mxu0 0.0
    %437 = vmatpush1.msra.mxu0 0.0
    %438 = vmatprep.subr.mxu0 0.0
    %439 = vmatpush1.msra.mxu0 0.0
    %440 = vmatprep.subr.mxu0 0.0
    %441 = vmatpush1.msra.mxu0 0.0
    %442 = vmatprep.subr.mxu0 0.0
    %443 = vmatpush1.msra.mxu0 0.0
    %444 = vmatprep.subr.mxu0 0.0
    %445 = vmatpush1.msra.mxu0 0.0
    %446 = vmatprep.subr.mxu0 0.0
    %447 = vmatpush1.msra.mxu0 0.0
    %448 = vmatprep.subr.mxu0 0.0
    %449 = vmatpush1.msra.mxu0 0.0
    %450 = vmatprep.subr.mxu0 0.0
    %451 = vmatpush1.msra.mxu0 0.0
    %452 = vmatprep.subr.mxu0 0.0
    %453 = vmatpush1.msra.mxu0 0.0
    %454 = vmatprep.subr.mxu0 0.0
    %455 = vmatpush1.msra.mxu0 0.0
    %456 = vmatprep.subr.mxu0 0.0
    %457 = vmatpush1.msra.mxu0 0.0
    %458 = vmatprep.subr.mxu0 0.0
    %459 = vmatpush1.msra.mxu0 0.0
    %460 = vmatprep.subr.mxu0 0.0
    %461 = vmatpush1.msra.mxu0 0.0
    %462 = vmatprep.subr.mxu0 0.0
    %463 = vmatpush1.msra.mxu0 0.0
    %464 = vmatprep.subr.mxu0 0.0
    %465 = vmatpush1.msra.mxu0 0.0
    %466 = vmatprep.subr.mxu0 0.0
    %467 = vmatpush1.msra.mxu0 0.0
    %468 = vmatprep.subr.mxu0 0.0
    %469 = vmatpush1.msra.mxu0 0.0
    %470 = vmatprep.subr.mxu0 0.0
    %471 = vmatpush1.msra.mxu0 0.0
    %472 = vmatprep.subr.mxu0 0.0
    %473 = vmatpush1.msra.mxu0 0.0
    %474 = vmatprep.subr.mxu0 0.0
    %475 = vmatpush1.msra.mxu0 0.0
    %476 = vmatprep.subr.mxu0 0.0
    %477 = vmatpush1.msra.mxu0 0.0
    %478 = vmatprep.subr.mxu0 0.0
    %479 = vmatpush1.msra.mxu0 0.0
    %480 = vmatprep.subr.mxu0 0.0
    %481 = vmatpush1.msra.mxu0 0.0
    %482 = vmatprep.subr.mxu0 0.0
    %483 = vmatpush1.msra.mxu0 0.0
    %484 = vmatprep.subr.mxu0 0.0
    %485 = vmatpush1.msra.mxu0 0.0
    %486 = vmatprep.subr.mxu0 0.0
    %487 = vmatpush1.msra.mxu0 0.0
    %488 = vmatprep.subr.mxu0 0.0
    %489 = vmatpush1.msra.mxu0 0.0
    %490 = vmatprep.subr.mxu0 0.0
    %491 = vmatpush1.msra.mxu0 0.0
    %492 = vmatprep.mubr.f32.mxu0 0.0
    %493 = vmatmul.mubr.f32.gmra.mrb[0].mxu0 %v426
    %v494 = vpop.f32.mrb[0].mxu0
    %v495 = vadd.f32 0.0, %v494
    %v496 = vpop.f32.mrb[0].mxu0
    %497 = vdwg.mxu0
    %v499 = vsel %vm380, %v422, 0
    %501 = vmatprep.subr.mxu0 0.0
    %502 = vmatpush1.msra.mxu0 %v68
    %503 = vmatprep.subr.mxu0 0.0
    %504 = vmatpush1.msra.mxu0 0.0
    %505 = vmatprep.subr.mxu0 0.0
    %506 = vmatpush1.msra.mxu0 0.0
    %507 = vmatprep.subr.mxu0 0.0
    %508 = vmatpush1.msra.mxu0 0.0
    %509 = vmatprep.subr.mxu0 0.0
    %510 = vmatpush1.msra.mxu0 0.0
    %511 = vmatprep.subr.mxu0 0.0
    %512 = vmatpush1.msra.mxu0 0.0
    %513 = vmatprep.subr.mxu0 0.0
    %514 = vmatpush1.msra.mxu0 0.0
    %515 = vmatprep.subr.mxu0 0.0
    %516 = vmatpush1.msra.mxu0 0.0
    %517 = vmatprep.subr.mxu0 0.0
    %518 = vmatpush1.msra.mxu0 0.0
    %519 = vmatprep.subr.mxu0 0.0
    %520 = vmatpush1.msra.mxu0 0.0
    %521 = vmatprep.subr.mxu0 0.0
    %522 = vmatpush1.msra.mxu0 0.0
    %523 = vmatprep.subr.mxu0 0.0
    %524 = vmatpush1.msra.mxu0 0.0
    %525 = vmatprep.subr.mxu0 0.0
    %526 = vmatpush1.msra.mxu0 0.0
    %527 = vmatprep.subr.mxu0 0.0
    %528 = vmatpush1.msra.mxu0 0.0
    %529 = vmatprep.subr.mxu0 0.0
    %530 = vmatpush1.msra.mxu0 0.0
    %531 = vmatprep.subr.mxu0 0.0
    %532 = vmatpush1.msra.mxu0 0.0
    %533 = vmatprep.subr.mxu0 0.0
    %534 = vmatpush1.msra.mxu0 0.0
    %535 = vmatprep.subr.mxu0 0.0
    %536 = vmatpush1.msra.mxu0 0.0
    %537 = vmatprep.subr.mxu0 0.0
    %538 = vmatpush1.msra.mxu0 0.0
    %539 = vmatprep.subr.mxu0 0.0
    %540 = vmatpush1.msra.mxu0 0.0
    %541 = vmatprep.subr.mxu0 0.0
    %542 = vmatpush1.msra.mxu0 0.0
    %543 = vmatprep.subr.mxu0 0.0
    %544 = vmatpush1.msra.mxu0 0.0
    %545 = vmatprep.subr.mxu0 0.0
    %546 = vmatpush1.msra.mxu0 0.0
    %547 = vmatprep.subr.mxu0 0.0
    %548 = vmatpush1.msra.mxu0 0.0
    %549 = vmatprep.subr.mxu0 0.0
    %550 = vmatpush1.msra.mxu0 0.0
    %551 = vmatprep.subr.mxu0 0.0
    %552 = vmatpush1.msra.mxu0 0.0
    %553 = vmatprep.subr.mxu0 0.0
    %554 = vmatpush1.msra.mxu0 0.0
    %555 = vmatprep.subr.mxu0 0.0
    %556 = vmatpush1.msra.mxu0 0.0
    %557 = vmatprep.subr.mxu0 0.0
    %558 = vmatpush1.msra.mxu0 0.0
    %559 = vmatprep.subr.mxu0 0.0
    %560 = vmatpush1.msra.mxu0 0.0
    %561 = vmatprep.subr.mxu0 0.0
    %562 = vmatpush1.msra.mxu0 0.0
    %563 = vmatprep.subr.mxu0 0.0
    %564 = vmatpush1.msra.mxu0 0.0
    %565 = vmatprep.mubr.f32.mxu0 0.0
    %566 = vmatmul.mubr.f32.gmra.mrb[0].mxu0 %v499
    %v567 = vpop.f32.mrb[0].mxu0
    %v568 = vadd.f32 0.0, %v567
    %v569 = vpop.f32.mrb[0].mxu0
    %570 = vdwg.mxu0
    %v572 = vsel %vm380, %v423, 0
    %574 = vmatprep.subr.mxu0 0.0
    %575 = vmatpush1.msra.mxu0 %v69
    %576 = vmatprep.subr.mxu0 0.0
    %577 = vmatpush1.msra.mxu0 0.0
    %578 = vmatprep.subr.mxu0 0.0
    %579 = vmatpush1.msra.mxu0 0.0
    %580 = vmatprep.subr.mxu0 0.0
    %581 = vmatpush1.msra.mxu0 0.0
    %582 = vmatprep.subr.mxu0 0.0
    %583 = vmatpush1.msra.mxu0 0.0
    %584 = vmatprep.subr.mxu0 0.0
    %585 = vmatpush1.msra.mxu0 0.0
    %586 = vmatprep.subr.mxu0 0.0
    %587 = vmatpush1.msra.mxu0 0.0
    %588 = vmatprep.subr.mxu0 0.0
    %589 = vmatpush1.msra.mxu0 0.0
    %590 = vmatprep.subr.mxu0 0.0
    %591 = vmatpush1.msra.mxu0 0.0
    %592 = vmatprep.subr.mxu0 0.0
    %593 = vmatpush1.msra.mxu0 0.0
    %594 = vmatprep.subr.mxu0 0.0
    %595 = vmatpush1.msra.mxu0 0.0
    %596 = vmatprep.subr.mxu0 0.0
    %597 = vmatpush1.msra.mxu0 0.0
    %598 = vmatprep.subr.mxu0 0.0
    %599 = vmatpush1.msra.mxu0 0.0
    %600 = vmatprep.subr.mxu0 0.0
    %601 = vmatpush1.msra.mxu0 0.0
    %602 = vmatprep.subr.mxu0 0.0
    %603 = vmatpush1.msra.mxu0 0.0
    %604 = vmatprep.subr.mxu0 0.0
    %605 = vmatpush1.msra.mxu0 0.0
    %606 = vmatprep.subr.mxu0 0.0
    %607 = vmatpush1.msra.mxu0 0.0
    %608 = vmatprep.subr.mxu0 0.0
    %609 = vmatpush1.msra.mxu0 0.0
    %610 = vmatprep.subr.mxu0 0.0
    %611 = vmatpush1.msra.mxu0 0.0
    %612 = vmatprep.subr.mxu0 0.0
    %613 = vmatpush1.msra.mxu0 0.0
    %614 = vmatprep.subr.mxu0 0.0
    %615 = vmatpush1.msra.mxu0 0.0
    %616 = vmatprep.subr.mxu0 0.0
    %617 = vmatpush1.msra.mxu0 0.0
    %618 = vmatprep.subr.mxu0 0.0
    %619 = vmatpush1.msra.mxu0 0.0
    %620 = vmatprep.subr.mxu0 0.0
    %621 = vmatpush1.msra.mxu0 0.0
    %622 = vmatprep.subr.mxu0 0.0
    %623 = vmatpush1.msra.mxu0 0.0
    %624 = vmatprep.subr.mxu0 0.0
    %625 = vmatpush1.msra.mxu0 0.0
    %626 = vmatprep.subr.mxu0 0.0
    %627 = vmatpush1.msra.mxu0 0.0
    %628 = vmatprep.subr.mxu0 0.0
    %629 = vmatpush1.msra.mxu0 0.0
    %630 = vmatprep.subr.mxu0 0.0
    %631 = vmatpush1.msra.mxu0 0.0
    %632 = vmatprep.subr.mxu0 0.0
    %633 = vmatpush1.msra.mxu0 0.0
    %634 = vmatprep.subr.mxu0 0.0
    %635 = vmatpush1.msra.mxu0 0.0
    %636 = vmatprep.subr.mxu0 0.0
    %637 = vmatpush1.msra.mxu0 0.0
    %638 = vmatprep.mubr.f32.mxu0 0.0
    %639 = vmatmul.mubr.f32.gmra.mrb[0].mxu0 %v572
    %v640 = vpop.f32.mrb[0].mxu0
    %v641 = vadd.f32 0.0, %v640
    %v642 = vpop.f32.mrb[0].mxu0
    %643 = vdwg.mxu0
    %v645 = vsel %vm380, %v424, 0
    %647 = vmatprep.subr.mxu0 0.0
    %648 = vmatpush1.msra.mxu0 %v70
    %649 = vmatprep.subr.mxu0 0.0
    %650 = vmatpush1.msra.mxu0 0.0
    %651 = vmatprep.subr.mxu0 0.0
    %652 = vmatpush1.msra.mxu0 0.0
    %653 = vmatprep.subr.mxu0 0.0
    %654 = vmatpush1.msra.mxu0 0.0
    %655 = vmatprep.subr.mxu0 0.0
    %656 = vmatpush1.msra.mxu0 0.0
    %657 = vmatprep.subr.mxu0 0.0
    %658 = vmatpush1.msra.mxu0 0.0
    %659 = vmatprep.subr.mxu0 0.0
    %660 = vmatpush1.msra.mxu0 0.0
    %661 = vmatprep.subr.mxu0 0.0
    %662 = vmatpush1.msra.mxu0 0.0
    %663 = vmatprep.subr.mxu0 0.0
    %664 = vmatpush1.msra.mxu0 0.0
    %665 = vmatprep.subr.mxu0 0.0
    %666 = vmatpush1.msra.mxu0 0.0
    %667 = vmatprep.subr.mxu0 0.0
    %668 = vmatpush1.msra.mxu0 0.0
    %669 = vmatprep.subr.mxu0 0.0
    %670 = vmatpush1.msra.mxu0 0.0
    %671 = vmatprep.subr.mxu0 0.0
    %672 = vmatpush1.msra.mxu0 0.0
    %673 = vmatprep.subr.mxu0 0.0
    %674 = vmatpush1.msra.mxu0 0.0
    %675 = vmatprep.subr.mxu0 0.0
    %676 = vmatpush1.msra.mxu0 0.0
    %677 = vmatprep.subr.mxu0 0.0
    %678 = vmatpush1.msra.mxu0 0.0
    %679 = vmatprep.subr.mxu0 0.0
    %680 = vmatpush1.msra.mxu0 0.0
    %681 = vmatprep.subr.mxu0 0.0
    %682 = vmatpush1.msra.mxu0 0.0
    %683 = vmatprep.subr.mxu0 0.0
    %684 = vmatpush1.msra.mxu0 0.0
    %685 = vmatprep.subr.mxu0 0.0
    %686 = vmatpush1.msra.mxu0 0.0
    %687 = vmatprep.subr.mxu0 0.0
    %688 = vmatpush1.msra.mxu0 0.0
    %689 = vmatprep.subr.mxu0 0.0
    %690 = vmatpush1.msra.mxu0 0.0
    %691 = vmatprep.subr.mxu0 0.0
    %692 = vmatpush1.msra.mxu0 0.0
    %693 = vmatprep.subr.mxu0 0.0
    %694 = vmatpush1.msra.mxu0 0.0
    %695 = vmatprep.subr.mxu0 0.0
    %696 = vmatpush1.msra.mxu0 0.0
    %697 = vmatprep.subr.mxu0 0.0
    %698 = vmatpush1.msra.mxu0 0.0
    %699 = vmatprep.subr.mxu0 0.0
    %700 = vmatpush1.msra.mxu0 0.0
    %701 = vmatprep.subr.mxu0 0.0
    %702 = vmatpush1.msra.mxu0 0.0
    %703 = vmatprep.subr.mxu0 0.0
    %704 = vmatpush1.msra.mxu0 0.0
    %705 = vmatprep.subr.mxu0 0.0
    %706 = vmatpush1.msra.mxu0 0.0
    %707 = vmatprep.subr.mxu0 0.0
    %708 = vmatpush1.msra.mxu0 0.0
    %709 = vmatprep.subr.mxu0 0.0
    %710 = vmatpush1.msra.mxu0 0.0
    %711 = vmatprep.mubr.f32.mxu0 0.0
    %712 = vmatmul.mubr.f32.gmra.mrb[0].mxu0 %v645
    %v713 = vpop.f32.mrb[0].mxu0
    %v714 = vadd.f32 0.0, %v713
    %v715 = vpop.f32.mrb[0].mxu0
    %716 = vdwg.mxu0
    %718 = vrot.lane.b32.xlu0 %v568, 32
    %v719 = vpop.permute.xlu0 %718
    %722 = vrot.lane.b32.xlu0 %v641, 64
    %v723 = vpop.permute.xlu0 %722
    %726 = vrot.lane.b32.xlu0 %v714, 96
    %v727 = vpop.permute.xlu0 %726
    %v729 = vsel %vm75, %v495, %v719
    %vm730 = vcmask 523264
    %v731 = vsel %vm730, %v729, %v723
    %vm732 = vcmask 785408
    %v733 = vsel %vm732, %v731, %v727
    %734 = vrot.lane.b32.xlu0 %v422, 8
    %v735 = vpop.permute.xlu0 %734
    %737 = vrot.lane.b32.xlu0 %v423, 16
    %v738 = vpop.permute.xlu0 %737
    %740 = vrot.lane.b32.xlu0 %v424, 24
    %v741 = vpop.permute.xlu0 %740
    %v743 = vsel %vm380, %v421, %v735
    %vm744 = vcmask 130048
    %v745 = vsel %vm744, %v743, %v738
    %vm746 = vcmask 195584
    %v747 = vsel %vm746, %v745, %v741
    %748 = vst [vmem:[#allocation8] sm:$0xff] %v733
    %749 = vst.msk [vmem:[#allocation9] sm:$0xff] %vm75, %v747
    // Predicated region
    $region26: #{tpu_custom_call.1} parent=1 // pred_check
      _
    $region27: #{tpu_custom_call.1} parent=1 // pred_check_branch
      %751 = sbr.rel (0) target = $region29
    $region28: #{tpu_custom_call.1} parent=1 // pred_region
      %s753 = ssub.s32 128, 128
      %754 = vsyncadd [#allocation4], %s753
      %s756 = sshll.u32 [#allocation8], 4
      %s757 = int_to_ptr.vmem [resolvable:$true] %s756
      %759 = dma.vmem_to_hbm [thread:$0]  %s757, 128, %s3, [#allocation4]
    $region29: #{tpu_custom_call.1} parent=1 // pred_fallthru
      _
    // Predicated region
    $region30: #{tpu_custom_call.1} parent=1 // pred_check
      _
    $region31: #{tpu_custom_call.1} parent=1 // pred_check_branch
      %761 = sbr.rel (0) target = $region33
    $region32: #{tpu_custom_call.1} parent=1 // pred_region
      %s763 = ssub.s32 128, 128
      %764 = vsyncadd [#allocation10], %s763
      %s766 = sshll.u32 [#allocation9], 4
      %s767 = int_to_ptr.vmem [resolvable:$true] %s766
      %769 = dma.vmem_to_hbm [thread:$0]  %s767, 128, %s4, [#allocation10]
    $region33: #{tpu_custom_call.1} parent=1 // pred_fallthru
      _
    // Predicated region
    $region34: #{tpu_custom_call.1} parent=1 // pred_check
      _
    $region35: #{tpu_custom_call.1} parent=1 // pred_check_branch
      %771 = sbr.rel (0) target = $region37
    $region36: #{tpu_custom_call.1} parent=1 // pred_region
      %772 = dma.done [#allocation4], 128
    $region37: #{tpu_custom_call.1} parent=1 // pred_fallthru
      _
    // Predicated region
    $region38: #{tpu_custom_call.1} parent=1 // pred_check
      _
    $region39: #{tpu_custom_call.1} parent=1 // pred_check_branch
      %774 = sbr.rel (0) target = $region41
    $region40: #{tpu_custom_call.1} parent=1 // pred_region
      %775 = dma.done [#allocation10], 128
    $region41: #{tpu_custom_call.1} parent=1 // pred_fallthru
      _
    %776 = vsyncpa [#allocation3], 1
    %777 = vsyncpa [#allocation6], 1
    %778 = vsyncpa [#allocation4], 1
    %779 = vsyncpa [#allocation10], 1

</llo_original>
